<compile_context>
chip_gen: v7x
topology: tpu7x:2x2x1
jax: 0.10.0
libtpu: 0.0.40
codegen_flags: <defaults>
</compile_context>

<pallas_src>
import functools

import jax
import jax.numpy as jnp
from jax.experimental import pallas as pl
from jax.experimental.pallas import tpu as pltpu

_LANE = 128      # TPU lane width (last dim)
_SUBLANE = 8     # TPU sublane width (second-to-last dim)


def _round_up(x, m):
    return ((x + m - 1) // m) * m


# ----------------------------------------------------------------------------
# Fused head kernel: both heads computed from the same resident x tile,
# results packed into one lane-dense output slab.
#   cols [0, n_cls)        : class logits  = x @ Wc + bc
#   cols [n_cls, n_cls+2)  : kpt coords    = sigmoid(MLP(x))
# ----------------------------------------------------------------------------
def _pose_head_kernel(*refs, num_kpt_layers, n_cls, compute_dtype):
    x_ref = refs[0]
    wc_ref, bc_ref = refs[1], refs[2]
    kpt_refs = refs[3:3 + 2 * num_kpt_layers]
    o_ref = refs[3 + 2 * num_kpt_layers]

    xc = x_ref[...].astype(compute_dtype)

    # ---- class head (single linear, packed into cols [0, n_cls)) ----------
    logits_slab = jnp.dot(xc, wc_ref[...],
                          preferred_element_type=jnp.float32) + bc_ref[...]

    # ---- kpt head (MLP, final layer packed into cols [n_cls, n_cls+2)) ----
    h = xc
    for i in range(num_kpt_layers):                 # static unroll
        w = kpt_refs[2 * i][...]
        b = kpt_refs[2 * i + 1][...]                # (1, N) f32, broadcasts
        y = jnp.dot(h, w, preferred_element_type=jnp.float32) + b
        if i < num_kpt_layers - 1:
            y = jnp.maximum(y, 0.0).astype(compute_dtype)
        h = y
    coords_slab = jax.nn.sigmoid(h)                 # f32

    col = jax.lax.broadcasted_iota(jnp.int32, o_ref.shape, dimension=1)
    is_coord = (col >= n_cls) & (col < n_cls + 2)
    o_ref[...] = jnp.where(is_coord, coords_slab, logits_slab).astype(o_ref.dtype)


# ----------------------------------------------------------------------------
# Parameter construction / packing
# ----------------------------------------------------------------------------
def init_mlp_params(key, input_dim, hidden_dim, output_dim, num_layers):
    """Returns list of (W (in,out), b (out,)) — W is the PyTorch weight, transposed."""
    h = [hidden_dim] * (num_layers - 1)
    in_dims = [input_dim] + h
    out_dims = h + [output_dim]
    params = []
    for n_in, n_out in zip(in_dims, out_dims):
        key, kw, kb = jax.random.split(key, 3)
        bound = 1.0 / jnp.sqrt(jnp.float32(n_in))
        w_pt = jax.random.uniform(kw, (n_out, n_in), jnp.float32, -bound, bound)
        b = jax.random.uniform(kb, (n_out,), jnp.float32, -bound, bound)
        params.append((w_pt.T, b))
    return params


def pack_head_params(class_params, kpt_params, num_classes, hidden_dim,
                     *, param_dtype=jnp.bfloat16):
    """Pack both heads' weights once, lane-padded / column-packed for the kernel.

    - class weight -> (hidden_dim, N_OUT), columns [0, C+1)
    - kpt final weight -> (H_pad, N_OUT), columns [C+1, C+3)
    - intermediate kpt weights padded to H_pad lanes; layer-0 K stays un-padded
      so the activation never needs a K pre-pad.
    Weights stored in `param_dtype` (bf16 default); biases stay f32.
    """
    n_cls = num_classes + 1
    n_out = _round_up(n_cls + 2, _LANE)
    d = hidden_dim
    h_pad = _round_up(hidden_dim, _LANE)

    (wc, bc), = class_params
    wc_p = jnp.zeros((d, n_out), param_dtype).at[:, :n_cls].set(wc.astype(param_dtype))
    bc_p = jnp.zeros((1, n_out), jnp.float32).at[0, :n_cls].set(bc)

    kpt_packed = []
    num_k = len(kpt_params)
    for i, (w, b) in enumerate(kpt_params):
        k_in, k_out = w.shape
        k_in_pad = d if i == 0 else h_pad           # layer 0 consumes raw x
        if i < num_k - 1:
            n_pad, col_off = h_pad, 0
        else:
            n_pad, col_off = n_out, n_cls           # final layer -> coord cols
        w_p = (jnp.zeros((k_in_pad, n_pad), param_dtype)
               .at[:k_in, col_off:col_off + k_out].set(w.astype(param_dtype)))
        b_p = (jnp.zeros((1, n_pad), jnp.float32)
               .at[0, col_off:col_off + k_out].set(b))
        kpt_packed.append((w_p, b_p))

    return dict(wc=wc_p, bc=bc_p, kpt=kpt_packed, n_cls=n_cls, n_out=n_out,
                d=d, compute_dtype=param_dtype)


# ----------------------------------------------------------------------------
# Fused forward: one pallas_call for both heads
# ----------------------------------------------------------------------------
def pose_head_forward(hs, packed, *, tile_m=512):
    """hs: (..., hidden_dim) -> (logits (..., C+1), coords (..., 2))."""
    lead = hs.shape[:-1]
    d = hs.shape[-1]
    assert d == packed["d"], "hidden_dim mismatch with packed params"
    x2d = hs.reshape(-1, d)
    M = x2d.shape[0]

    n_cls, n_out = packed["n_cls"], packed["n_out"]
    kpt = packed["kpt"]
    num_k = len(kpt)
    cd = packed["compute_dtype"]

    # M tiling: multiple of 8 sublanes; grid pipelines over M when large.
    tile = min(tile_m, _round_up(M, _SUBLANE))
    grid_m = pl.cdiv(M, tile)

    in_specs = [pl.BlockSpec((tile, d), lambda i: (i, 0)),
                pl.BlockSpec(packed["wc"].shape, lambda i: (0, 0)),
                pl.BlockSpec(packed["bc"].shape, lambda i: (0, 0))]
    flat = [packed["wc"], packed["bc"]]
    for w, b in kpt:
        in_specs.append(pl.BlockSpec(w.shape, lambda i: (0, 0)))
        in_specs.append(pl.BlockSpec(b.shape, lambda i: (0, 0)))
        flat.extend((w, b))

    # Exact-ish VMEM budget: resident params (x2 to cover double-buffering),
    # double-buffered activation tiles, a few in-kernel intermediates,
    # +50% headroom; capped at 48 MiB so it also fits v7x's 64 MiB VMEM/TC.
    def nbytes(a):
        return a.size * a.dtype.itemsize
    h_max = max(max(w.shape[1] for w, _ in kpt), n_out)
    est = 2 * sum(nbytes(a) for a in flat)
    est += 2 * tile * d * 4            # double-buffered input tile (f32)
    est += 2 * tile * n_out * 4        # double-buffered output tile (f32)
    est += 3 * tile * h_max * 4        # in-kernel intermediates
    vmem_limit = int(min(48 * 2 ** 20, max(16 * 2 ** 20, (3 * est) // 2)))

    kernel = functools.partial(_pose_head_kernel, num_kpt_layers=num_k,
                               n_cls=n_cls, compute_dtype=cd)

    out = pl.pallas_call(
        kernel,
        out_shape=jax.ShapeDtypeStruct((grid_m * tile, n_out), jnp.float32),
        grid=(grid_m,),
        in_specs=in_specs,
        out_specs=pl.BlockSpec((tile, n_out), lambda i: (i, 0)),
        compiler_params=pltpu.CompilerParams(
            dimension_semantics=("parallel",),
            vmem_limit_bytes=vmem_limit,
        ),
    )(x2d, *flat)

    logits = out[:M, :n_cls].reshape(*lead, n_cls)
    coords = out[:M, n_cls:n_cls + 2].reshape(*lead, 2)
    return logits, coords


# ----------------------------------------------------------------------------
# PoseTransformer prediction head (class_embed + kpt_embed + sigmoid + aux)
# ----------------------------------------------------------------------------
def pose_transformer_head(hs, packed, aux_loss=True, tile_m=512):
    """hs: (num_decoder_layers, batch, num_queries, hidden_dim)."""
    outputs_class, outputs_coord = pose_head_forward(hs, packed, tile_m=tile_m)
    out = {"pred_logits": outputs_class[-1], "pred_coords": outputs_coord[-1]}
    if aux_loss:
        out["aux_outputs"] = [
            {"pred_logits": a, "pred_coords": b}
            for a, b in zip(outputs_class[:-1], outputs_coord[:-1])
        ]
    return out


if __name__ == "__main__":
    key = jax.random.PRNGKey(0)
    k_hs, k_cls, k_kpt = jax.random.split(key, 3)

    # Small shapes consistent with the module's forward:
    #   hs = transformer(...)[0] -> (num_dec_layers, batch, num_queries, d_model)
    num_dec_layers, batch, num_queries, hidden_dim = 2, 2, 8, 32
    num_joints = 4  # cfg.MODEL.NUM_JOINTS

    hs = jax.random.normal(
        k_hs, (num_dec_layers, batch, num_queries, hidden_dim), jnp.float32)

    # class_embed = nn.Linear(hidden_dim, num_joints + 1)  (single layer)
    class_params = init_mlp_params(k_cls, hidden_dim, hidden_dim, num_joints + 1, 1)
    # kpt_embed = MLP(hidden_dim, hidden_dim, 2, 3)
    kpt_params = init_mlp_params(k_kpt, hidden_dim, hidden_dim, 2, 3)

    # ---------------- pure-JAX reference of the same semantics ----------------
    def ref_mlp(x, params, sigmoid=False):
        n = len(params)
        y = x
        for i, (w, b) in enumerate(params):
            y = y @ w + b
            if i < n - 1:
                y = jnp.maximum(y, 0.0)
        if sigmoid:
            y = jax.nn.sigmoid(y)
        return y

    ref_logits = ref_mlp(hs, class_params)
    ref_coords = ref_mlp(hs, kpt_params, sigmoid=True)

    # ---- exact-check path: f32 weights / f32 MXU feed ------------------------
    packed_f32 = pack_head_params(class_params, kpt_params, num_joints,
                                  hidden_dim, param_dtype=jnp.float32)
    out_f32 = jax.block_until_ready(
        pose_transformer_head(hs, packed_f32, aux_loss=True))

    assert jnp.allclose(out_f32["pred_logits"], ref_logits[-1], atol=1e-5, rtol=1e-5)
    assert jnp.allclose(out_f32["pred_coords"], ref_coords[-1], atol=1e-5, rtol=1e-5)
    for layer_idx, aux in enumerate(out_f32["aux_outputs"]):
        assert jnp.allclose(aux["pred_logits"], ref_logits[layer_idx],
                            atol=1e-5, rtol=1e-5)
        assert jnp.allclose(aux["pred_coords"], ref_coords[layer_idx],
                            atol=1e-5, rtol=1e-5)

    # ---- production path: bf16-stored weights, bf16 MXU feed, f32 accumulate -
    packed_bf16 = pack_head_params(class_params, kpt_params, num_joints,
                                   hidden_dim)  # param_dtype defaults to bf16
    out_bf16 = jax.block_until_ready(
        pose_transformer_head(hs, packed_bf16, aux_loss=True))

    assert jnp.allclose(out_bf16["pred_logits"], ref_logits[-1], atol=5e-2)
    assert jnp.allclose(out_bf16["pred_coords"], ref_coords[-1], atol=5e-2)
    for layer_idx, aux in enumerate(out_bf16["aux_outputs"]):
        assert jnp.allclose(aux["pred_logits"], ref_logits[layer_idx], atol=5e-2)
        assert jnp.allclose(aux["pred_coords"], ref_coords[layer_idx], atol=5e-2)

    print("KERNEL_OK")
</pallas_src>

<mosaic_0001>
module attributes {stable_mosaic.version = 11 : i64} {
  func.func @_pose_head_kernel(%arg0: i32, %arg1: memref<32x32xf32, #tpu.memory_space<vmem>>, %arg2: memref<32x128xf32, #tpu.memory_space<vmem>>, %arg3: memref<1x128xf32, #tpu.memory_space<vmem>>, %arg4: memref<32x128xf32, #tpu.memory_space<vmem>>, %arg5: memref<1x128xf32, #tpu.memory_space<vmem>>, %arg6: memref<128x128xf32, #tpu.memory_space<vmem>>, %arg7: memref<1x128xf32, #tpu.memory_space<vmem>>, %arg8: memref<128x128xf32, #tpu.memory_space<vmem>>, %arg9: memref<1x128xf32, #tpu.memory_space<vmem>>, %arg10: memref<32x128xf32, #tpu.memory_space<vmem>>) attributes {dimension_semantics = [#tpu.dimension_semantics<parallel>], iteration_bounds = array<i64: 1>, scalar_prefetch = 0 : i64, scratch_operands = 0 : i64, tpu.core_type = #tpu.core_type<tc>, window_params = [{transform_indices = @transform_0, window_bounds = array<i64: 32, 32>}, {pipeline_mode = #tpu.pipeline_mode<synchronous>, transform_indices = @transform_1, window_bounds = array<i64: 32, 128>}, {pipeline_mode = #tpu.pipeline_mode<synchronous>, transform_indices = @transform_2, window_bounds = array<i64: 1, 128>}, {pipeline_mode = #tpu.pipeline_mode<synchronous>, transform_indices = @transform_3, window_bounds = array<i64: 32, 128>}, {pipeline_mode = #tpu.pipeline_mode<synchronous>, transform_indices = @transform_4, window_bounds = array<i64: 1, 128>}, {pipeline_mode = #tpu.pipeline_mode<synchronous>, transform_indices = @transform_5, window_bounds = array<i64: 128, 128>}, {pipeline_mode = #tpu.pipeline_mode<synchronous>, transform_indices = @transform_6, window_bounds = array<i64: 1, 128>}, {pipeline_mode = #tpu.pipeline_mode<synchronous>, transform_indices = @transform_7, window_bounds = array<i64: 128, 128>}, {pipeline_mode = #tpu.pipeline_mode<synchronous>, transform_indices = @transform_8, window_bounds = array<i64: 1, 128>}, {transform_indices = @transform_9, window_bounds = array<i64: 32, 128>}]} {
    %c0 = arith.constant 0 : index
    %c0_0 = arith.constant 0 : index
    %0 = vector.load %arg1[%c0, %c0_0] : memref<32x32xf32, #tpu.memory_space<vmem>>, vector<32x32xf32>
    %c0_1 = arith.constant 0 : index
    %c0_2 = arith.constant 0 : index
    %1 = vector.load %arg2[%c0_1, %c0_2] : memref<32x128xf32, #tpu.memory_space<vmem>>, vector<32x128xf32>
    %cst = arith.constant dense<0.000000e+00> : vector<32x128xf32>
    %2 = tpu.matmul %0, %1, %cst {dimension_numbers = #tpu.dot_dimension_numbers<[1], [0], [0], [1], [0, 0, 1, 1], [], []>} : vector<32x32xf32>, vector<32x128xf32>, vector<32x128xf32> -> vector<32x128xf32>
    %c0_3 = arith.constant 0 : index
    %c0_4 = arith.constant 0 : index
    %3 = vector.load %arg3[%c0_3, %c0_4] : memref<1x128xf32, #tpu.memory_space<vmem>>, vector<1x128xf32>
    %4 = vector.broadcast %3 : vector<1x128xf32> to vector<32x128xf32>
    %5 = arith.addf %2, %4 : vector<32x128xf32>
    %c0_5 = arith.constant 0 : index
    %c0_6 = arith.constant 0 : index
    %6 = vector.load %arg4[%c0_5, %c0_6] : memref<32x128xf32, #tpu.memory_space<vmem>>, vector<32x128xf32>
    %c0_7 = arith.constant 0 : index
    %c0_8 = arith.constant 0 : index
    %7 = vector.load %arg5[%c0_7, %c0_8] : memref<1x128xf32, #tpu.memory_space<vmem>>, vector<1x128xf32>
    %cst_9 = arith.constant dense<0.000000e+00> : vector<32x128xf32>
    %8 = tpu.matmul %0, %6, %cst_9 {dimension_numbers = #tpu.dot_dimension_numbers<[1], [0], [0], [1], [0, 0, 1, 1], [], []>} : vector<32x32xf32>, vector<32x128xf32>, vector<32x128xf32> -> vector<32x128xf32>
    %9 = vector.broadcast %7 : vector<1x128xf32> to vector<32x128xf32>
    %10 = arith.addf %8, %9 : vector<32x128xf32>
    %cst_10 = arith.constant 0.000000e+00 : f32
    %11 = vector.broadcast %cst_10 : f32 to vector<32x128xf32>
    %12 = arith.maximumf %10, %11 : vector<32x128xf32>
    %c0_11 = arith.constant 0 : index
    %c0_12 = arith.constant 0 : index
    %13 = vector.load %arg6[%c0_11, %c0_12] : memref<128x128xf32, #tpu.memory_space<vmem>>, vector<128x128xf32>
    %c0_13 = arith.constant 0 : index
    %c0_14 = arith.constant 0 : index
    %14 = vector.load %arg7[%c0_13, %c0_14] : memref<1x128xf32, #tpu.memory_space<vmem>>, vector<1x128xf32>
    %cst_15 = arith.constant dense<0.000000e+00> : vector<32x128xf32>
    %15 = tpu.matmul %12, %13, %cst_15 {dimension_numbers = #tpu.dot_dimension_numbers<[1], [0], [0], [1], [0, 0, 1, 1], [], []>} : vector<32x128xf32>, vector<128x128xf32>, vector<32x128xf32> -> vector<32x128xf32>
    %16 = vector.broadcast %14 : vector<1x128xf32> to vector<32x128xf32>
    %17 = arith.addf %15, %16 : vector<32x128xf32>
    %cst_16 = arith.constant 0.000000e+00 : f32
    %18 = vector.broadcast %cst_16 : f32 to vector<32x128xf32>
    %19 = arith.maximumf %17, %18 : vector<32x128xf32>
    %c0_17 = arith.constant 0 : index
    %c0_18 = arith.constant 0 : index
    %20 = vector.load %arg8[%c0_17, %c0_18] : memref<128x128xf32, #tpu.memory_space<vmem>>, vector<128x128xf32>
    %c0_19 = arith.constant 0 : index
    %c0_20 = arith.constant 0 : index
    %21 = vector.load %arg9[%c0_19, %c0_20] : memref<1x128xf32, #tpu.memory_space<vmem>>, vector<1x128xf32>
    %cst_21 = arith.constant dense<0.000000e+00> : vector<32x128xf32>
    %22 = tpu.matmul %19, %20, %cst_21 {dimension_numbers = #tpu.dot_dimension_numbers<[1], [0], [0], [1], [0, 0, 1, 1], [], []>} : vector<32x128xf32>, vector<128x128xf32>, vector<32x128xf32> -> vector<32x128xf32>
    %23 = vector.broadcast %21 : vector<1x128xf32> to vector<32x128xf32>
    %24 = arith.addf %22, %23 : vector<32x128xf32>
    %25 = arith.negf %24 : vector<32x128xf32>
    %26 = math.exp %25 : vector<32x128xf32>
    %cst_22 = arith.constant 1.000000e+00 : f32
    %27 = vector.broadcast %cst_22 : f32 to vector<32x128xf32>
    %28 = arith.addf %27, %26 : vector<32x128xf32>
    %29 = arith.divf %27, %28 : vector<32x128xf32>
    %30 = tpu.iota {dimensions = array<i32: 1>} : vector<32x128xi32>
    %c5_i32 = arith.constant 5 : i32
    %31 = vector.broadcast %c5_i32 : i32 to vector<32x128xi32>
    %32 = arith.cmpi sge, %30, %31 : vector<32x128xi32>
    %c7_i32 = arith.constant 7 : i32
    %33 = vector.broadcast %c7_i32 : i32 to vector<32x128xi32>
    %34 = arith.cmpi slt, %30, %33 : vector<32x128xi32>
    %35 = arith.andi %32, %34 : vector<32x128xi1>
    %36 = arith.select %35, %29, %5 : vector<32x128xi1>, vector<32x128xf32>
    %c0_23 = arith.constant 0 : index
    %c0_24 = arith.constant 0 : index
    %37 = vector.load %arg10[%c0_23, %c0_24] : memref<32x128xf32, #tpu.memory_space<vmem>>, vector<32x128xf32>
    tpu.vector_store %arg10[%c0_23, %c0_24], %36 {strides = array<i32>} : memref<32x128xf32, #tpu.memory_space<vmem>>, vector<32x128xf32>,
    return
  }
  func.func @transform_0(%arg0: i32) -> (i32, i32) {
    %c0_i32 = arith.constant 0 : i32
    %c0_i32_0 = arith.constant 0 : i32
    return %arg0, %c0_i32 : i32, i32
  }
  func.func @transform_1(%arg0: i32) -> (i32, i32) {
    %c0_i32 = arith.constant 0 : i32
    %c0_i32_0 = arith.constant 0 : i32
    %c0_i32_1 = arith.constant 0 : i32
    return %c0_i32, %c0_i32_0 : i32, i32
  }
  func.func @transform_2(%arg0: i32) -> (i32, i32) {
    %c0_i32 = arith.constant 0 : i32
    %c0_i32_0 = arith.constant 0 : i32
    %c0_i32_1 = arith.constant 0 : i32
    return %c0_i32, %c0_i32_0 : i32, i32
  }
  func.func @transform_3(%arg0: i32) -> (i32, i32) {
    %c0_i32 = arith.constant 0 : i32
    %c0_i32_0 = arith.constant 0 : i32
    %c0_i32_1 = arith.constant 0 : i32
    return %c0_i32, %c0_i32_0 : i32, i32
  }
  func.func @transform_4(%arg0: i32) -> (i32, i32) {
    %c0_i32 = arith.constant 0 : i32
    %c0_i32_0 = arith.constant 0 : i32
    %c0_i32_1 = arith.constant 0 : i32
    return %c0_i32, %c0_i32_0 : i32, i32
  }
  func.func @transform_5(%arg0: i32) -> (i32, i32) {
    %c0_i32 = arith.constant 0 : i32
    %c0_i32_0 = arith.constant 0 : i32
    %c0_i32_1 = arith.constant 0 : i32
    return %c0_i32, %c0_i32_0 : i32, i32
  }
  func.func @transform_6(%arg0: i32) -> (i32, i32) {
    %c0_i32 = arith.constant 0 : i32
    %c0_i32_0 = arith.constant 0 : i32
    %c0_i32_1 = arith.constant 0 : i32
    return %c0_i32, %c0_i32_0 : i32, i32
  }
  func.func @transform_7(%arg0: i32) -> (i32, i32) {
    %c0_i32 = arith.constant 0 : i32
    %c0_i32_0 = arith.constant 0 : i32
    %c0_i32_1 = arith.constant 0 : i32
    return %c0_i32, %c0_i32_0 : i32, i32
  }
  func.func @transform_8(%arg0: i32) -> (i32, i32) {
    %c0_i32 = arith.constant 0 : i32
    %c0_i32_0 = arith.constant 0 : i32
    %c0_i32_1 = arith.constant 0 : i32
    return %c0_i32, %c0_i32_0 : i32, i32
  }
  func.func @transform_9(%arg0: i32) -> (i32, i32) {
    %c0_i32 = arith.constant 0 : i32
    %c0_i32_0 = arith.constant 0 : i32
    return %arg0, %c0_i32 : i32, i32
  }
}

</mosaic_0001>

<llo_original>
// kernel: tpu_custom_call.1
$region0: #{tpu_custom_call.1}
  #allocation0 [shape = 'u32[]', space=smem, size = 0x4, offset = 0x4, fixed_abs, tag = 'smem constant byte address 0x4 - core index']
  #allocation1 [shape = 'u32[144,128]{1,0:T(1,128)}', space=vmem, size = 0x12000, scoped, tag = 'internal scratch']
  %s0 = inlined_call_operand.hbm [shape: f32[32,32], index: 0, kind: input, shape index: {}]
  %s1 = inlined_call_operand.hbm [shape: f32[32,128], index: 1, kind: input, shape index: {}]
  %s2 = inlined_call_operand.vmem [shape: f32[1,128], index: 2, kind: input, shape index: {}]
  %s3 = inlined_call_operand.hbm [shape: f32[32,128], index: 3, kind: input, shape index: {}]
  %s4 = inlined_call_operand.vmem [shape: f32[1,128], index: 4, kind: input, shape index: {}]
  %s5 = inlined_call_operand.hbm [shape: f32[128,128], index: 5, kind: input, shape index: {}]
  %s6 = inlined_call_operand.vmem [shape: f32[1,128], index: 6, kind: input, shape index: {}]
  %s7 = inlined_call_operand.hbm [shape: f32[128,128], index: 7, kind: input, shape index: {}]
  %s8 = inlined_call_operand.vmem [shape: f32[1,128], index: 8, kind: input, shape index: {}]
  %s9 = inlined_call_operand.hbm [shape: f32[32,128], index: 9, kind: output, shape index: {}]
  %s10 = sld [smem:[#allocation0]]
  $region66: #{tpu_custom_call.1} parent=0
    _
  %s12 = ssub.s32 1, %s10
  %s13 = scalar_select 0, %s12, %s10
  $region1: #{tpu_custom_call.1} parent=0
    #allocation2 [shape = 'u8[16384]{0}', space=vmem, size = 0x4000, scoped, tag = 'input window, operand 0, single buffered']
    #allocation3 [shape = 's32[1]{0}', space=sflag, size = 0x4, scoped, tag = 'scoped memory for tpu_custom_call.1']
    #allocation4 [shape = 's32[1]{0}', space=sflag, size = 0x4, scoped, tag = 'scoped memory for tpu_custom_call.1']
    #allocation5 [shape = 'u8[16384]{0}', space=vmem, size = 0x4000, scoped, tag = 'input window, operand 1, single buffered']
    #allocation6 [shape = 's32[1]{0}', space=sflag, size = 0x4, scoped, tag = 'scoped memory for tpu_custom_call.1']
    #allocation7 [shape = 'u8[16384]{0}', space=vmem, size = 0x4000, scoped, tag = 'input window, operand 3, single buffered']
    #allocation8 [shape = 'u8[65536]{0}', space=vmem, size = 0x10000, scoped, tag = 'input window, operand 5, single buffered']
    #allocation9 [shape = 's32[1]{0}', space=sflag, size = 0x4, scoped, tag = 'scoped memory for tpu_custom_call.1']
    #allocation10 [shape = 'u8[65536]{0}', space=vmem, size = 0x10000, scoped, tag = 'input window, operand 7, single buffered']
    #allocation11 [shape = 'u8[16384]{0}', space=vmem, size = 0x4000, scoped, tag = 'output window, operand 0, single buffered']
    %14 = vsyncpa [#allocation3], 0
    %15 = vsyncpa [#allocation6], 0
    %16 = vsyncpa [#allocation9], 0
    %17 = vsyncpa [#allocation4], 0
    // Predicated region
    $region2: #{tpu_custom_call.1} parent=1 // pred_check
      _
    $region3: #{tpu_custom_call.1} parent=1 // pred_check_branch
      %19 = sbr.rel (0) target = $region5
    $region4: #{tpu_custom_call.1} parent=1 // pred_region
      %s21 = ssub.s32 512, 512
      %22 = vsyncadd [#allocation3], %s21
      %s23 = sshll.u32 [#allocation2], 4
      %s24 = int_to_ptr.vmem [resolvable:$true] %s23
      %29 = dma.hbm_to_vmem [thread:$0]  %s0, 512, %s24, [#allocation3], 128, 128, 8
    $region5: #{tpu_custom_call.1} parent=1 // pred_fallthru
      _
    // Predicated region
    $region6: #{tpu_custom_call.1} parent=1 // pred_check
      _
    $region7: #{tpu_custom_call.1} parent=1 // pred_check_branch
      %31 = sbr.rel (0) target = $region9
    $region8: #{tpu_custom_call.1} parent=1 // pred_region
      %s33 = ssub.s32 512, 512
      %34 = vsyncadd [#allocation6], %s33
      %s35 = sshll.u32 [#allocation5], 4
      %s36 = int_to_ptr.vmem [resolvable:$true] %s35
      %41 = dma.hbm_to_vmem [thread:$0]  %s1, 512, %s36, [#allocation6], 128, 128, 8
    $region9: #{tpu_custom_call.1} parent=1 // pred_fallthru
      _
    // Predicated region
    $region10: #{tpu_custom_call.1} parent=1 // pred_check
      _
    $region11: #{tpu_custom_call.1} parent=1 // pred_check_branch
      %43 = sbr.rel (0) target = $region13
    $region12: #{tpu_custom_call.1} parent=1 // pred_region
      _
    $region13: #{tpu_custom_call.1} parent=1 // pred_fallthru
      _
    // Predicated region
    $region14: #{tpu_custom_call.1} parent=1 // pred_check
      _
    $region15: #{tpu_custom_call.1} parent=1 // pred_check_branch
      %45 = sbr.rel (0) target = $region17
    $region16: #{tpu_custom_call.1} parent=1 // pred_region
      %s47 = ssub.s32 512, 512
      %48 = vsyncadd [#allocation6], %s47
      %s49 = sshll.u32 [#allocation7], 4
      %s50 = int_to_ptr.vmem [resolvable:$true] %s49
      %55 = dma.hbm_to_vmem [thread:$0]  %s3, 512, %s50, [#allocation6], 128, 128, 8
    $region17: #{tpu_custom_call.1} parent=1 // pred_fallthru
      _
    // Predicated region
    $region18: #{tpu_custom_call.1} parent=1 // pred_check
      _
    $region19: #{tpu_custom_call.1} parent=1 // pred_check_branch
      %57 = sbr.rel (0) target = $region21
    $region20: #{tpu_custom_call.1} parent=1 // pred_region
      _
    $region21: #{tpu_custom_call.1} parent=1 // pred_fallthru
      _
    // Predicated region
    $region22: #{tpu_custom_call.1} parent=1 // pred_check
      _
    $region23: #{tpu_custom_call.1} parent=1 // pred_check_branch
      %59 = sbr.rel (0) target = $region25
    $region24: #{tpu_custom_call.1} parent=1 // pred_region
      %s61 = ssub.s32 2048, 2048
      %62 = vsyncadd [#allocation9], %s61
      %s63 = sshll.u32 [#allocation8], 4
      %s64 = int_to_ptr.vmem [resolvable:$true] %s63
      %69 = dma.hbm_to_vmem [thread:$0]  %s5, 2048, %s64, [#allocation9], 128, 128, 8
    $region25: #{tpu_custom_call.1} parent=1 // pred_fallthru
      _
    // Predicated region
    $region26: #{tpu_custom_call.1} parent=1 // pred_check
      _
    $region27: #{tpu_custom_call.1} parent=1 // pred_check_branch
      %71 = sbr.rel (0) target = $region29
    $region28: #{tpu_custom_call.1} parent=1 // pred_region
      _
    $region29: #{tpu_custom_call.1} parent=1 // pred_fallthru
      _
    // Predicated region
    $region30: #{tpu_custom_call.1} parent=1 // pred_check
      _
    $region31: #{tpu_custom_call.1} parent=1 // pred_check_branch
      %73 = sbr.rel (0) target = $region33
    $region32: #{tpu_custom_call.1} parent=1 // pred_region
      %s75 = ssub.s32 2048, 2048
      %76 = vsyncadd [#allocation9], %s75
      %s77 = sshll.u32 [#allocation10], 4
      %s78 = int_to_ptr.vmem [resolvable:$true] %s77
      %83 = dma.hbm_to_vmem [thread:$0]  %s7, 2048, %s78, [#allocation9], 128, 128, 8
    $region33: #{tpu_custom_call.1} parent=1 // pred_fallthru
      _
    // Predicated region
    $region34: #{tpu_custom_call.1} parent=1 // pred_check
      _
    $region35: #{tpu_custom_call.1} parent=1 // pred_check_branch
      %85 = sbr.rel (0) target = $region37
    $region36: #{tpu_custom_call.1} parent=1 // pred_region
      _
    $region37: #{tpu_custom_call.1} parent=1 // pred_fallthru
      _
    // Predicated region
    $region38: #{tpu_custom_call.1} parent=1 // pred_check
      _
    $region39: #{tpu_custom_call.1} parent=1 // pred_check_branch
      %87 = sbr.rel (0) target = $region41
    $region40: #{tpu_custom_call.1} parent=1 // pred_region
      %88 = dma.done [#allocation3], 512
    $region41: #{tpu_custom_call.1} parent=1 // pred_fallthru
      _
    // Predicated region
    $region42: #{tpu_custom_call.1} parent=1 // pred_check
      _
    $region43: #{tpu_custom_call.1} parent=1 // pred_check_branch
      %90 = sbr.rel (0) target = $region45
    $region44: #{tpu_custom_call.1} parent=1 // pred_region
      %91 = dma.done [#allocation6], 512
    $region45: #{tpu_custom_call.1} parent=1 // pred_fallthru
      _
    // Predicated region
    $region46: #{tpu_custom_call.1} parent=1 // pred_check
      _
    $region47: #{tpu_custom_call.1} parent=1 // pred_check_branch
      %93 = sbr.rel (0) target = $region49
    $region48: #{tpu_custom_call.1} parent=1 // pred_region
      %94 = dma.done [#allocation6], 512
    $region49: #{tpu_custom_call.1} parent=1 // pred_fallthru
      _
    // Predicated region
    $region50: #{tpu_custom_call.1} parent=1 // pred_check
      _
    $region51: #{tpu_custom_call.1} parent=1 // pred_check_branch
      %96 = sbr.rel (0) target = $region53
    $region52: #{tpu_custom_call.1} parent=1 // pred_region
      %97 = dma.done [#allocation9], 2048
    $region53: #{tpu_custom_call.1} parent=1 // pred_fallthru
      _
    // Predicated region
    $region54: #{tpu_custom_call.1} parent=1 // pred_check
      _
    $region55: #{tpu_custom_call.1} parent=1 // pred_check_branch
      %99 = sbr.rel (0) target = $region57
    $region56: #{tpu_custom_call.1} parent=1 // pred_region
      %100 = dma.done [#allocation9], 2048
    $region57: #{tpu_custom_call.1} parent=1 // pred_fallthru
      _
    %v101 = vld [vmem:[#allocation2] sm:$0xff]
    %v102 = vld [vmem:[#allocation2 + $0x8] sm:$0xff]
    %v103 = vld [vmem:[#allocation2 + $0x10] sm:$0xff]
    %v104 = vld [vmem:[#allocation2 + $0x18] sm:$0xff]
    %v105 = vld [vmem:[#allocation5] sm:$0xff]
    %v106 = vld [vmem:[#allocation5 + $0x8] sm:$0xff]
    %v107 = vld [vmem:[#allocation5 + $0x10] sm:$0xff]
    %v108 = vld [vmem:[#allocation5 + $0x18] sm:$0xff]
    %v109 = vld [vmem:[%s2] sm:$0x1]
    %v111 = vlaneseq
    %v112 = vshrl.u32 %v111, 7
    %v113 = vsub.s32 0, %v112
    %v114 = vrot.slane %v109, %v113
    %vm116 = vcmask 261120
    %v118 = vsel %vm116, %v101, 0
    %v121 = vsel %vm116, %v102, 0
    %v124 = vsel %vm116, %v103, 0
    %v127 = vsel %vm116, %v104, 0
    %129 = vmatprep.subr.mxu0 0.0
    %130 = vmatpush1.msra.mxu0 %v105
    %131 = vmatprep.subr.mxu0 0.0
    %132 = vmatpush1.msra.mxu0 %v106
    %133 = vmatprep.subr.mxu0 0.0
    %134 = vmatpush1.msra.mxu0 %v107
    %135 = vmatprep.subr.mxu0 0.0
    %136 = vmatpush1.msra.mxu0 %v108
    %137 = vmatprep.subr.mxu0 0.0
    %138 = vmatpush1.msra.mxu0 0.0
    %139 = vmatprep.subr.mxu0 0.0
    %140 = vmatpush1.msra.mxu0 0.0
    %141 = vmatprep.subr.mxu0 0.0
    %142 = vmatpush1.msra.mxu0 0.0
    %143 = vmatprep.subr.mxu0 0.0
    %144 = vmatpush1.msra.mxu0 0.0
    %145 = vmatprep.subr.mxu0 0.0
    %146 = vmatpush1.msra.mxu0 0.0
    %147 = vmatprep.subr.mxu0 0.0
    %148 = vmatpush1.msra.mxu0 0.0
    %149 = vmatprep.subr.mxu0 0.0
    %150 = vmatpush1.msra.mxu0 0.0
    %151 = vmatprep.subr.mxu0 0.0
    %152 = vmatpush1.msra.mxu0 0.0
    %153 = vmatprep.subr.mxu0 0.0
    %154 = vmatpush1.msra.mxu0 0.0
    %155 = vmatprep.subr.mxu0 0.0
    %156 = vmatpush1.msra.mxu0 0.0
    %157 = vmatprep.subr.mxu0 0.0
    %158 = vmatpush1.msra.mxu0 0.0
    %159 = vmatprep.subr.mxu0 0.0
    %160 = vmatpush1.msra.mxu0 0.0
    %161 = vmatprep.subr.mxu0 0.0
    %162 = vmatpush1.msra.mxu0 0.0
    %163 = vmatprep.subr.mxu0 0.0
    %164 = vmatpush1.msra.mxu0 0.0
    %165 = vmatprep.subr.mxu0 0.0
    %166 = vmatpush1.msra.mxu0 0.0
    %167 = vmatprep.subr.mxu0 0.0
    %168 = vmatpush1.msra.mxu0 0.0
    %169 = vmatprep.subr.mxu0 0.0
    %170 = vmatpush1.msra.mxu0 0.0
    %171 = vmatprep.subr.mxu0 0.0
    %172 = vmatpush1.msra.mxu0 0.0
    %173 = vmatprep.subr.mxu0 0.0
    %174 = vmatpush1.msra.mxu0 0.0
    %175 = vmatprep.subr.mxu0 0.0
    %176 = vmatpush1.msra.mxu0 0.0
    %177 = vmatprep.subr.mxu0 0.0
    %178 = vmatpush1.msra.mxu0 0.0
    %179 = vmatprep.subr.mxu0 0.0
    %180 = vmatpush1.msra.mxu0 0.0
    %181 = vmatprep.subr.mxu0 0.0
    %182 = vmatpush1.msra.mxu0 0.0
    %183 = vmatprep.subr.mxu0 0.0
    %184 = vmatpush1.msra.mxu0 0.0
    %185 = vmatprep.subr.mxu0 0.0
    %186 = vmatpush1.msra.mxu0 0.0
    %187 = vmatprep.subr.mxu0 0.0
    %188 = vmatpush1.msra.mxu0 0.0
    %189 = vmatprep.subr.mxu0 0.0
    %190 = vmatpush1.msra.mxu0 0.0
    %191 = vmatprep.subr.mxu0 0.0
    %192 = vmatpush1.msra.mxu0 0.0
    %193 = vmatprep.mubr.f32.mxu0 0.0
    %194 = vmatmul.mubr.f32.gmra.mrb[0].mxu0 %v118
    %v195 = vpop.f32.mrb[0].mxu0
    %v196 = vadd.f32 %v114, %v195
    %v197 = vpop.f32.mrb[0].mxu0
    %198 = vmatprep.mubr.f32.mxu0 0.0
    %199 = vmatmul.mubr.f32.gmra.mrb[0].mxu0 %v121
    %v200 = vpop.f32.mrb[0].mxu0
    %v201 = vadd.f32 %v114, %v200
    %v202 = vpop.f32.mrb[0].mxu0
    %203 = vmatprep.mubr.f32.mxu0 0.0
    %204 = vmatmul.mubr.f32.gmra.mrb[0].mxu0 %v124
    %v205 = vpop.f32.mrb[0].mxu0
    %v206 = vadd.f32 %v114, %v205
    %v207 = vpop.f32.mrb[0].mxu0
    %208 = vmatprep.mubr.f32.mxu0 0.0
    %209 = vmatmul.mubr.f32.gmra.mrb[0].mxu0 %v127
    %v210 = vpop.f32.mrb[0].mxu0
    %v211 = vadd.f32 %v114, %v210
    %v212 = vpop.f32.mrb[0].mxu0
    %213 = vdwg.mxu0
    %v214 = vld [vmem:[#allocation7] sm:$0xff]
    %v215 = vld [vmem:[#allocation7 + $0x8] sm:$0xff]
    %v216 = vld [vmem:[#allocation7 + $0x10] sm:$0xff]
    %v217 = vld [vmem:[#allocation7 + $0x18] sm:$0xff]
    %v218 = vld [vmem:[%s4] sm:$0x1]
    %v220 = vlaneseq
    %v221 = vshrl.u32 %v220, 7
    %v222 = vsub.s32 0, %v221
    %v223 = vrot.slane %v218, %v222
    %225 = vmatprep.subr.mxu0 0.0
    %226 = vmatpush1.msra.mxu0 %v214
    %227 = vmatprep.subr.mxu0 0.0
    %228 = vmatpush1.msra.mxu0 %v215
    %229 = vmatprep.subr.mxu0 0.0
    %230 = vmatpush1.msra.mxu0 %v216
    %231 = vmatprep.subr.mxu0 0.0
    %232 = vmatpush1.msra.mxu0 %v217
    %233 = vmatprep.subr.mxu0 0.0
    %234 = vmatpush1.msra.mxu0 0.0
    %235 = vmatprep.subr.mxu0 0.0
    %236 = vmatpush1.msra.mxu0 0.0
    %237 = vmatprep.subr.mxu0 0.0
    %238 = vmatpush1.msra.mxu0 0.0
    %239 = vmatprep.subr.mxu0 0.0
    %240 = vmatpush1.msra.mxu0 0.0
    %241 = vmatprep.subr.mxu0 0.0
    %242 = vmatpush1.msra.mxu0 0.0
    %243 = vmatprep.subr.mxu0 0.0
    %244 = vmatpush1.msra.mxu0 0.0
    %245 = vmatprep.subr.mxu0 0.0
    %246 = vmatpush1.msra.mxu0 0.0
    %247 = vmatprep.subr.mxu0 0.0
    %248 = vmatpush1.msra.mxu0 0.0
    %249 = vmatprep.subr.mxu0 0.0
    %250 = vmatpush1.msra.mxu0 0.0
    %251 = vmatprep.subr.mxu0 0.0
    %252 = vmatpush1.msra.mxu0 0.0
    %253 = vmatprep.subr.mxu0 0.0
    %254 = vmatpush1.msra.mxu0 0.0
    %255 = vmatprep.subr.mxu0 0.0
    %256 = vmatpush1.msra.mxu0 0.0
    %257 = vmatprep.subr.mxu0 0.0
    %258 = vmatpush1.msra.mxu0 0.0
    %259 = vmatprep.subr.mxu0 0.0
    %260 = vmatpush1.msra.mxu0 0.0
    %261 = vmatprep.subr.mxu0 0.0
    %262 = vmatpush1.msra.mxu0 0.0
    %263 = vmatprep.subr.mxu0 0.0
    %264 = vmatpush1.msra.mxu0 0.0
    %265 = vmatprep.subr.mxu0 0.0
    %266 = vmatpush1.msra.mxu0 0.0
    %267 = vmatprep.subr.mxu0 0.0
    %268 = vmatpush1.msra.mxu0 0.0
    %269 = vmatprep.subr.mxu0 0.0
    %270 = vmatpush1.msra.mxu0 0.0
    %271 = vmatprep.subr.mxu0 0.0
    %272 = vmatpush1.msra.mxu0 0.0
    %273 = vmatprep.subr.mxu0 0.0
    %274 = vmatpush1.msra.mxu0 0.0
    %275 = vmatprep.subr.mxu0 0.0
    %276 = vmatpush1.msra.mxu0 0.0
    %277 = vmatprep.subr.mxu0 0.0
    %278 = vmatpush1.msra.mxu0 0.0
    %279 = vmatprep.subr.mxu0 0.0
    %280 = vmatpush1.msra.mxu0 0.0
    %281 = vmatprep.subr.mxu0 0.0
    %282 = vmatpush1.msra.mxu0 0.0
    %283 = vmatprep.subr.mxu0 0.0
    %284 = vmatpush1.msra.mxu0 0.0
    %285 = vmatprep.subr.mxu0 0.0
    %286 = vmatpush1.msra.mxu0 0.0
    %287 = vmatprep.subr.mxu0 0.0
    %288 = vmatpush1.msra.mxu0 0.0
    %289 = vmatprep.mubr.f32.mxu0 0.0
    %290 = vmatmul.mubr.f32.gmra.mrb[0].mxu0 %v118
    %v291 = vpop.f32.mrb[0].mxu0
    %v292 = vadd.f32 %v223, %v291
    %v293 = vpop.f32.mrb[0].mxu0
    %294 = vmatprep.mubr.f32.mxu0 0.0
    %295 = vmatmul.mubr.f32.gmra.mrb[0].mxu0 %v121
    %v296 = vpop.f32.mrb[0].mxu0
    %v297 = vadd.f32 %v223, %v296
    %v298 = vpop.f32.mrb[0].mxu0
    %299 = vmatprep.mubr.f32.mxu0 0.0
    %300 = vmatmul.mubr.f32.gmra.mrb[0].mxu0 %v124
    %v301 = vpop.f32.mrb[0].mxu0
    %v302 = vadd.f32 %v223, %v301
    %v303 = vpop.f32.mrb[0].mxu0
    %304 = vmatprep.mubr.f32.mxu0 0.0
    %305 = vmatmul.mubr.f32.gmra.mrb[0].mxu0 %v127
    %v306 = vpop.f32.mrb[0].mxu0
    %v307 = vadd.f32 %v223, %v306
    %v308 = vpop.f32.mrb[0].mxu0
    %309 = vdwg.mxu0
    %v310 = vmax.f32 %v292, 0.0
    %v311 = vmax.f32 %v297, 0.0
    %v312 = vmax.f32 %v302, 0.0
    %v313 = vmax.f32 %v307, 0.0
    %v314 = vld [vmem:[#allocation8] sm:$0xff]
    %v315 = vld [vmem:[#allocation8 + $0x8] sm:$0xff]
    %v316 = vld [vmem:[#allocation8 + $0x10] sm:$0xff]
    %v317 = vld [vmem:[#allocation8 + $0x18] sm:$0xff]
    %v318 = vld [vmem:[#allocation8 + $0x20] sm:$0xff]
    %v319 = vld [vmem:[#allocation8 + $0x28] sm:$0xff]
    %v320 = vld [vmem:[#allocation8 + $0x30] sm:$0xff]
    %v321 = vld [vmem:[#allocation8 + $0x38] sm:$0xff]
    %v322 = vld [vmem:[#allocation8 + $0x40] sm:$0xff]
    %v323 = vld [vmem:[#allocation8 + $0x48] sm:$0xff]
    %v324 = vld [vmem:[#allocation8 + $0x50] sm:$0xff]
    %v325 = vld [vmem:[#allocation8 + $0x58] sm:$0xff]
    %v326 = vld [vmem:[#allocation8 + $0x60] sm:$0xff]
    %v327 = vld [vmem:[#allocation8 + $0x68] sm:$0xff]
    %v328 = vld [vmem:[#allocation8 + $0x70] sm:$0xff]
    %v329 = vld [vmem:[#allocation8 + $0x78] sm:$0xff]
    %v330 = vld [vmem:[%s6] sm:$0x1]
    %v332 = vlaneseq
    %v333 = vshrl.u32 %v332, 7
    %v334 = vsub.s32 0, %v333
    %v335 = vrot.slane %v330, %v334
    %337 = vmatprep.subr.mxu0 0.0
    %338 = vmatpush1.msra.mxu0 %v314
    %339 = vmatprep.subr.mxu0 0.0
    %340 = vmatpush1.msra.mxu0 %v315
    %341 = vmatprep.subr.mxu0 0.0
    %342 = vmatpush1.msra.mxu0 %v316
    %343 = vmatprep.subr.mxu0 0.0
    %344 = vmatpush1.msra.mxu0 %v317
    %345 = vmatprep.subr.mxu0 0.0
    %346 = vmatpush1.msra.mxu0 %v318
    %347 = vmatprep.subr.mxu0 0.0
    %348 = vmatpush1.msra.mxu0 %v319
    %349 = vmatprep.subr.mxu0 0.0
    %350 = vmatpush1.msra.mxu0 %v320
    %351 = vmatprep.subr.mxu0 0.0
    %352 = vmatpush1.msra.mxu0 %v321
    %353 = vmatprep.subr.mxu0 0.0
    %354 = vmatpush1.msra.mxu0 %v322
    %355 = vmatprep.subr.mxu0 0.0
    %356 = vmatpush1.msra.mxu0 %v323
    %357 = vmatprep.subr.mxu0 0.0
    %358 = vmatpush1.msra.mxu0 %v324
    %359 = vmatprep.subr.mxu0 0.0
    %360 = vmatpush1.msra.mxu0 %v325
    %361 = vmatprep.subr.mxu0 0.0
    %362 = vmatpush1.msra.mxu0 %v326
    %363 = vmatprep.subr.mxu0 0.0
    %364 = vmatpush1.msra.mxu0 %v327
    %365 = vmatprep.subr.mxu0 0.0
    %366 = vmatpush1.msra.mxu0 %v328
    %367 = vmatprep.subr.mxu0 0.0
    %368 = vmatpush1.msra.mxu0 %v329
    %369 = vmatprep.subr.mxu0 0.0
    %370 = vmatpush1.msra.mxu0 0.0
    %371 = vmatprep.subr.mxu0 0.0
    %372 = vmatpush1.msra.mxu0 0.0
    %373 = vmatprep.subr.mxu0 0.0
    %374 = vmatpush1.msra.mxu0 0.0
    %375 = vmatprep.subr.mxu0 0.0
    %376 = vmatpush1.msra.mxu0 0.0
    %377 = vmatprep.subr.mxu0 0.0
    %378 = vmatpush1.msra.mxu0 0.0
    %379 = vmatprep.subr.mxu0 0.0
    %380 = vmatpush1.msra.mxu0 0.0
    %381 = vmatprep.subr.mxu0 0.0
    %382 = vmatpush1.msra.mxu0 0.0
    %383 = vmatprep.subr.mxu0 0.0
    %384 = vmatpush1.msra.mxu0 0.0
    %385 = vmatprep.subr.mxu0 0.0
    %386 = vmatpush1.msra.mxu0 0.0
    %387 = vmatprep.subr.mxu0 0.0
    %388 = vmatpush1.msra.mxu0 0.0
    %389 = vmatprep.subr.mxu0 0.0
    %390 = vmatpush1.msra.mxu0 0.0
    %391 = vmatprep.subr.mxu0 0.0
    %392 = vmatpush1.msra.mxu0 0.0
    %393 = vmatprep.subr.mxu0 0.0
    %394 = vmatpush1.msra.mxu0 0.0
    %395 = vmatprep.subr.mxu0 0.0
    %396 = vmatpush1.msra.mxu0 0.0
    %397 = vmatprep.subr.mxu0 0.0
    %398 = vmatpush1.msra.mxu0 0.0
    %399 = vmatprep.subr.mxu0 0.0
    %400 = vmatpush1.msra.mxu0 0.0
    %401 = vmatprep.mubr.f32.mxu0 0.0
    %402 = vmatmul.mubr.f32.gmra.mrb[0].mxu0 %v310
    %v403 = vpop.f32.mrb[0].mxu0
    %v404 = vadd.f32 %v335, %v403
    %v405 = vpop.f32.mrb[0].mxu0
    %406 = vmatprep.mubr.f32.mxu0 0.0
    %407 = vmatmul.mubr.f32.gmra.mrb[0].mxu0 %v311
    %v408 = vpop.f32.mrb[0].mxu0
    %v409 = vadd.f32 %v335, %v408
    %v410 = vpop.f32.mrb[0].mxu0
    %411 = vmatprep.mubr.f32.mxu0 0.0
    %412 = vmatmul.mubr.f32.gmra.mrb[0].mxu0 %v312
    %v413 = vpop.f32.mrb[0].mxu0
    %v414 = vadd.f32 %v335, %v413
    %v415 = vpop.f32.mrb[0].mxu0
    %416 = vmatprep.mubr.f32.mxu0 0.0
    %417 = vmatmul.mubr.f32.gmra.mrb[0].mxu0 %v313
    %v418 = vpop.f32.mrb[0].mxu0
    %v419 = vadd.f32 %v335, %v418
    %v420 = vpop.f32.mrb[0].mxu0
    %421 = vdwg.mxu0
    %v422 = vmax.f32 %v404, 0.0
    %v423 = vmax.f32 %v409, 0.0
    %v424 = vmax.f32 %v414, 0.0
    %v425 = vmax.f32 %v419, 0.0
    %v426 = vld [vmem:[#allocation10] sm:$0xff]
    %v427 = vld [vmem:[#allocation10 + $0x8] sm:$0xff]
    %v428 = vld [vmem:[#allocation10 + $0x10] sm:$0xff]
    %v429 = vld [vmem:[#allocation10 + $0x18] sm:$0xff]
    %v430 = vld [vmem:[#allocation10 + $0x20] sm:$0xff]
    %v431 = vld [vmem:[#allocation10 + $0x28] sm:$0xff]
    %v432 = vld [vmem:[#allocation10 + $0x30] sm:$0xff]
    %v433 = vld [vmem:[#allocation10 + $0x38] sm:$0xff]
    %v434 = vld [vmem:[#allocation10 + $0x40] sm:$0xff]
    %v435 = vld [vmem:[#allocation10 + $0x48] sm:$0xff]
    %v436 = vld [vmem:[#allocation10 + $0x50] sm:$0xff]
    %v437 = vld [vmem:[#allocation10 + $0x58] sm:$0xff]
    %v438 = vld [vmem:[#allocation10 + $0x60] sm:$0xff]
    %v439 = vld [vmem:[#allocation10 + $0x68] sm:$0xff]
    %v440 = vld [vmem:[#allocation10 + $0x70] sm:$0xff]
    %v441 = vld [vmem:[#allocation10 + $0x78] sm:$0xff]
    %v442 = vld [vmem:[%s8] sm:$0x1]
    %v444 = vlaneseq
    %v445 = vshrl.u32 %v444, 7
    %v446 = vsub.s32 0, %v445
    %v447 = vrot.slane %v442, %v446
    %449 = vmatprep.subr.mxu0 0.0
    %450 = vmatpush1.msra.mxu0 %v426
    %451 = vmatprep.subr.mxu0 0.0
    %452 = vmatpush1.msra.mxu0 %v427
    %453 = vmatprep.subr.mxu0 0.0
    %454 = vmatpush1.msra.mxu0 %v428
    %455 = vmatprep.subr.mxu0 0.0
    %456 = vmatpush1.msra.mxu0 %v429
    %457 = vmatprep.subr.mxu0 0.0
    %458 = vmatpush1.msra.mxu0 %v430
    %459 = vmatprep.subr.mxu0 0.0
    %460 = vmatpush1.msra.mxu0 %v431
    %461 = vmatprep.subr.mxu0 0.0
    %462 = vmatpush1.msra.mxu0 %v432
    %463 = vmatprep.subr.mxu0 0.0
    %464 = vmatpush1.msra.mxu0 %v433
    %465 = vmatprep.subr.mxu0 0.0
    %466 = vmatpush1.msra.mxu0 %v434
    %467 = vmatprep.subr.mxu0 0.0
    %468 = vmatpush1.msra.mxu0 %v435
    %469 = vmatprep.subr.mxu0 0.0
    %470 = vmatpush1.msra.mxu0 %v436
    %471 = vmatprep.subr.mxu0 0.0
    %472 = vmatpush1.msra.mxu0 %v437
    %473 = vmatprep.subr.mxu0 0.0
    %474 = vmatpush1.msra.mxu0 %v438
    %475 = vmatprep.subr.mxu0 0.0
    %476 = vmatpush1.msra.mxu0 %v439
    %477 = vmatprep.subr.mxu0 0.0
    %478 = vmatpush1.msra.mxu0 %v440
    %479 = vmatprep.subr.mxu0 0.0
    %480 = vmatpush1.msra.mxu0 %v441
    %481 = vmatprep.subr.mxu0 0.0
    %482 = vmatpush1.msra.mxu0 0.0
    %483 = vmatprep.subr.mxu0 0.0
    %484 = vmatpush1.msra.mxu0 0.0
    %485 = vmatprep.subr.mxu0 0.0
    %486 = vmatpush1.msra.mxu0 0.0
    %487 = vmatprep.subr.mxu0 0.0
    %488 = vmatpush1.msra.mxu0 0.0
    %489 = vmatprep.subr.mxu0 0.0
    %490 = vmatpush1.msra.mxu0 0.0
    %491 = vmatprep.subr.mxu0 0.0
    %492 = vmatpush1.msra.mxu0 0.0
    %493 = vmatprep.subr.mxu0 0.0
    %494 = vmatpush1.msra.mxu0 0.0
    %495 = vmatprep.subr.mxu0 0.0
    %496 = vmatpush1.msra.mxu0 0.0
    %497 = vmatprep.subr.mxu0 0.0
    %498 = vmatpush1.msra.mxu0 0.0
    %499 = vmatprep.subr.mxu0 0.0
    %500 = vmatpush1.msra.mxu0 0.0
    %501 = vmatprep.subr.mxu0 0.0
    %502 = vmatpush1.msra.mxu0 0.0
    %503 = vmatprep.subr.mxu0 0.0
    %504 = vmatpush1.msra.mxu0 0.0
    %505 = vmatprep.subr.mxu0 0.0
    %506 = vmatpush1.msra.mxu0 0.0
    %507 = vmatprep.subr.mxu0 0.0
    %508 = vmatpush1.msra.mxu0 0.0
    %509 = vmatprep.subr.mxu0 0.0
    %510 = vmatpush1.msra.mxu0 0.0
    %511 = vmatprep.subr.mxu0 0.0
    %512 = vmatpush1.msra.mxu0 0.0
    %513 = vmatprep.mubr.f32.mxu0 0.0
    %514 = vmatmul.mubr.f32.gmra.mrb[0].mxu0 %v422
    %v515 = vpop.f32.mrb[0].mxu0
    %v516 = vadd.f32 %v447, %v515
    %v517 = vpop.f32.mrb[0].mxu0
    %518 = vmatprep.mubr.f32.mxu0 0.0
    %519 = vmatmul.mubr.f32.gmra.mrb[0].mxu0 %v423
    %v520 = vpop.f32.mrb[0].mxu0
    %v521 = vadd.f32 %v447, %v520
    %v522 = vpop.f32.mrb[0].mxu0
    %523 = vmatprep.mubr.f32.mxu0 0.0
    %524 = vmatmul.mubr.f32.gmra.mrb[0].mxu0 %v424
    %v525 = vpop.f32.mrb[0].mxu0
    %v526 = vadd.f32 %v447, %v525
    %v527 = vpop.f32.mrb[0].mxu0
    %528 = vmatprep.mubr.f32.mxu0 0.0
    %529 = vmatmul.mubr.f32.gmra.mrb[0].mxu0 %v425
    %v530 = vpop.f32.mrb[0].mxu0
    %v531 = vadd.f32 %v447, %v530
    %v532 = vpop.f32.mrb[0].mxu0
    %533 = vdwg.mxu0
    %v534 = vxor.u32 %v516, 2147483648
    %v535 = vxor.u32 %v521, 2147483648
    %v536 = vxor.u32 %v526, 2147483648
    %v537 = vxor.u32 %v531, 2147483648
    %v538 = vmul.f32 %v534, 1.442695
    %v539 = vpow.pop %v538
    %v540 = vmul.f32 %v535, 1.442695
    %v541 = vpow.pop %v540
    %v542 = vmul.f32 %v536, 1.442695
    %v543 = vpow.pop %v542
    %v544 = vmul.f32 %v537, 1.442695
    %v545 = vpow.pop %v544
    %v546 = vadd.f32 %v539, 1.0
    %v547 = vadd.f32 %v541, 1.0
    %v548 = vadd.f32 %v543, 1.0
    %v549 = vadd.f32 %v545, 1.0
    %v550 = vrcp.pop %v546
    %v551 = vmul.f32 1.0, %v550
    %v552 = vrcp.pop %v547
    %v553 = vmul.f32 1.0, %v552
    %v554 = vrcp.pop %v548
    %v555 = vmul.f32 1.0, %v554
    %v556 = vrcp.pop %v549
    %v557 = vmul.f32 1.0, %v556
    %v558 = vlaneseq
    %v559 = vand.u32 %v558, 127
    %vm560 = vcmp.ge.s32.totalorder %v559, 5
    %vm561 = vcmp.lt.s32.totalorder %v559, 7
    %vm562 = vmand %vm560, %vm561
    %v563 = vsel %vm562, %v551, %v196
    %v564 = vsel %vm562, %v553, %v201
    %v565 = vsel %vm562, %v555, %v206
    %v566 = vsel %vm562, %v557, %v211
    %567 = vst [vmem:[#allocation11] sm:$0xff] %v563
    %568 = vst [vmem:[#allocation11 + $0x8] sm:$0xff] %v564
    %569 = vst [vmem:[#allocation11 + $0x10] sm:$0xff] %v565
    %570 = vst [vmem:[#allocation11 + $0x18] sm:$0xff] %v566
    // Predicated region
    $region58: #{tpu_custom_call.1} parent=1 // pred_check
      _
    $region59: #{tpu_custom_call.1} parent=1 // pred_check_branch
      %572 = sbr.rel (0) target = $region61
    $region60: #{tpu_custom_call.1} parent=1 // pred_region
      %s574 = ssub.s32 512, 512
      %575 = vsyncadd [#allocation4], %s574
      %s576 = sshll.u32 [#allocation11], 4
      %s577 = int_to_ptr.vmem [resolvable:$true] %s576
      %582 = dma.vmem_to_hbm [thread:$0]  %s577, 512, %s9, [#allocation4], 128, 128, 8
    $region61: #{tpu_custom_call.1} parent=1 // pred_fallthru
      _
    // Predicated region
    $region62: #{tpu_custom_call.1} parent=1 // pred_check
      _
    $region63: #{tpu_custom_call.1} parent=1 // pred_check_branch
      %584 = sbr.rel (0) target = $region65
    $region64: #{tpu_custom_call.1} parent=1 // pred_region
      %585 = dma.done [#allocation4], 512
    $region65: #{tpu_custom_call.1} parent=1 // pred_fallthru
      _
    %586 = vsyncpa [#allocation3], 1
    %587 = vsyncpa [#allocation6], 1
    %588 = vsyncpa [#allocation9], 1
    %589 = vsyncpa [#allocation4], 1

</llo_original>
